<compile_context>
chip_gen: v7x
topology: tpu7x:2x2x1
jax: 0.10.0
libtpu: 0.0.40
codegen_flags: <defaults>
</compile_context>

<pallas_src>
import jax
import jax.numpy as jnp
from jax.experimental import pallas as pl
from jax.experimental.pallas import tpu as pltpu


def vn_linear_kernel(x_ref, w_ref, b_ref, o_ref):
    # x_ref: [tm, Kf], w_ref: [Kf, tn], b_ref: [1, tn], o_ref: [tm, tn]
    acc = jnp.dot(x_ref[...], w_ref[...], preferred_element_type=jnp.float32)
    o_ref[...] = (acc + b_ref[...].astype(jnp.float32)).astype(o_ref.dtype)


def _round_up(x, m):
    return ((x + m - 1) // m) * m


def fold_vn_params(weight, bias, d=3):
    """Fold W[F_out, F_in] -> W_fold[F_in*d, F_out*d] = W^T (x) I_d, bias -> repeat d."""
    f_out, f_in = weight.shape
    eye = jnp.eye(d, dtype=weight.dtype)
    w_fold = jnp.einsum("of,de->fdoe", weight, eye).reshape(f_in * d, f_out * d)
    b_fold = jnp.repeat(bias, d).reshape(1, f_out * d)
    return w_fold, b_fold


# Working-set budget used to size the row tile; scoped limit handed to Mosaic.
# 44 MiB is safe on v7x (64 MiB physical) and leaves huge headroom on v5e/v6e.
_VMEM_BUDGET = 36 * 1024 * 1024
_VMEM_LIMIT = 44 * 1024 * 1024


def vn_linear(x, weight, bias, *, tm=16384, w_fold=None, b_fold=None):
    """x: [B, N, F_in, 3]; weight: [F_out, F_in]; bias: [F_out] -> [B, N, F_out, 3]."""
    B, N, F_in, D = x.shape
    F_out = weight.shape[0]
    Kf = F_in * D            # folded contraction width (x lanes)
    Nf = F_out * D           # folded output width (y lanes)
    M = B * N
    itemsize = jnp.dtype(x.dtype).itemsize

    # Hoistable fold (pass precomputed w_fold/b_fold when calling in a loop).
    if w_fold is None or b_fold is None:
        w_fold, b_fold = fold_vn_params(weight, bias, D)

    # Zero-copy input reshape: [B, N, F_in, 3] -> [M, F_in*3].
    x2d = x.reshape(M, Kf)

    # dtype-aware sublane multiple for the row-tile (f32: 8, bf16: 16, int8/fp8: 32).
    sub = {4: 8, 2: 16, 1: 32}.get(itemsize, 8)

    # --- output-column tiling only when the folded weight threatens VMEM -----
    w_bytes = Kf * Nf * itemsize
    if w_bytes > _VMEM_BUDGET // 2 and Nf > 512:
        tn = 512                                # multiple of 128 (lane tiling rule)
    else:
        tn = Nf                                 # whole folded width resident
    grid_n = pl.cdiv(Nf, tn)
    # TODO(synk): for extreme F_in where even one (Kf, tn) weight slab exceeds the
    # budget, a K-tiled accumulator against the unfolded weight would be needed.

    # --- row tile: largest sublane-multiple that fits the budget, capped at tm ---
    w_resident = 2 * (Kf * tn + tn) * itemsize          # double-buffered weight + bias
    per_row_bytes = 2 * (Kf + tn) * itemsize            # double-buffered x + y rows
    rows_budget = max(_VMEM_BUDGET - w_resident, sub * per_row_bytes)
    max_rows_budget = max(rows_budget // per_row_bytes, sub)
    tm_cap = max(min(tm, max_rows_budget), sub)
    tm_cap = (tm_cap // sub) * sub                      # round DOWN: stay in budget

    grid_m = pl.cdiv(M, tm_cap)
    # Keep >= 2 row blocks when there is enough work so v7x's two TensorCores
    # both get rows; costs only one extra ~0.35us step on single-core chips.
    if grid_m == 1 and M >= 4096:
        grid_m = 2
    # Balance row blocks (avoids one full tile + one tiny ragged tail).
    tm_eff = _round_up(pl.cdiv(M, grid_m), sub)
    grid_m = pl.cdiv(M, tm_eff)

    cost = pl.CostEstimate(
        flops=2 * M * Kf * Nf,
        transcendentals=0,
        bytes_accessed=(M * Kf + M * Nf + Kf * Nf + Nf) * itemsize,
    )

    # NOTE: no jnp.pad / [:M] slice — Pallas clamps the ragged last block's
    # writeback, and garbage rows/cols in the padded VMEM tile only ever feed
    # output elements that are discarded.
    out2d = pl.pallas_call(
        vn_linear_kernel,
        out_shape=jax.ShapeDtypeStruct((M, Nf), x.dtype),
        grid_spec=pltpu.PrefetchScalarGridSpec(
            num_scalar_prefetch=0,
            grid=(grid_m, grid_n),
            in_specs=[
                pl.BlockSpec((tm_eff, Kf), lambda i, j: (i, 0)),   # streamed rows
                pl.BlockSpec((Kf, tn), lambda i, j: (0, j)),       # (column-)resident weight
                pl.BlockSpec((1, tn), lambda i, j: (0, j)),        # resident bias
            ],
            out_specs=pl.BlockSpec((tm_eff, tn), lambda i, j: (i, j)),
        ),
        compiler_params=pltpu.CompilerParams(
            dimension_semantics=("parallel", "parallel"),
            vmem_limit_bytes=_VMEM_LIMIT,
        ),
        cost_estimate=cost,
    )(x2d, w_fold, b_fold)

    # Zero-copy output reshape: [M, F_out*3] -> [B, N, F_out, 3].
    return out2d.reshape(B, N, F_out, D)


if __name__ == "__main__":
    B, N, F_in, F_out = 2, 8, 32, 16

    key = jax.random.PRNGKey(0)
    kx, kw, kb = jax.random.split(key, 3)

    # Deterministic params (mimics nn.Linear uniform(-1/sqrt(F_in), 1/sqrt(F_in))).
    bound = 1.0 / (F_in ** 0.5)
    weight = jax.random.uniform(kw, (F_out, F_in), jnp.float32, -bound, bound)
    bias = jax.random.uniform(kb, (F_out,), jnp.float32, -bound, bound)

    x = jax.random.normal(kx, (B, N, F_in, 3), jnp.float32)

    y = jax.block_until_ready(vn_linear(x, weight, bias))

    # Reference (plain JAX) check of the PyTorch semantics.
    y_ref = jnp.einsum("bnfd,of->bnod", x, weight) + bias[None, None, :, None]
    assert y.shape == (B, N, F_out, 3)
    assert jnp.allclose(y, y_ref, atol=1e-5, rtol=1e-5)

    print("KERNEL_OK")
</pallas_src>

<mosaic_0001>
module attributes {stable_mosaic.version = 11 : i64} {
  func.func @vn_linear_kernel(%arg0: i32, %arg1: i32, %arg2: memref<16x96xf32, #tpu.memory_space<vmem>>, %arg3: memref<96x48xf32, #tpu.memory_space<vmem>>, %arg4: memref<1x48xf32, #tpu.memory_space<vmem>>, %arg5: memref<16x48xf32, #tpu.memory_space<vmem>>) attributes {dimension_semantics = [#tpu.dimension_semantics<parallel>, #tpu.dimension_semantics<parallel>], iteration_bounds = array<i64: 1, 1>, scalar_prefetch = 0 : i64, scratch_operands = 0 : i64, tpu.core_type = #tpu.core_type<tc>, window_params = [{transform_indices = @transform_0, window_bounds = array<i64: 16, 96>}, {transform_indices = @transform_1, window_bounds = array<i64: 96, 48>}, {transform_indices = @transform_2, window_bounds = array<i64: 1, 48>}, {transform_indices = @transform_3, window_bounds = array<i64: 16, 48>}]} {
    %c0 = arith.constant 0 : index
    %c0_0 = arith.constant 0 : index
    %0 = vector.load %arg2[%c0, %c0_0] : memref<16x96xf32, #tpu.memory_space<vmem>>, vector<16x96xf32>
    %c0_1 = arith.constant 0 : index
    %c0_2 = arith.constant 0 : index
    %1 = vector.load %arg3[%c0_1, %c0_2] : memref<96x48xf32, #tpu.memory_space<vmem>>, vector<96x48xf32>
    %cst = arith.constant dense<0.000000e+00> : vector<16x48xf32>
    %2 = tpu.matmul %0, %1, %cst {dimension_numbers = #tpu.dot_dimension_numbers<[1], [0], [0], [1], [0, 0, 1, 1], [], []>} : vector<16x96xf32>, vector<96x48xf32>, vector<16x48xf32> -> vector<16x48xf32>
    %c0_3 = arith.constant 0 : index
    %c0_4 = arith.constant 0 : index
    %3 = vector.load %arg4[%c0_3, %c0_4] : memref<1x48xf32, #tpu.memory_space<vmem>>, vector<1x48xf32>
    %4 = vector.broadcast %3 : vector<1x48xf32> to vector<16x48xf32>
    %5 = arith.addf %2, %4 : vector<16x48xf32>
    %c0_5 = arith.constant 0 : index
    %c0_6 = arith.constant 0 : index
    %6 = vector.load %arg5[%c0_5, %c0_6] : memref<16x48xf32, #tpu.memory_space<vmem>>, vector<16x48xf32>
    tpu.vector_store %arg5[%c0_5, %c0_6], %5 {strides = array<i32>} : memref<16x48xf32, #tpu.memory_space<vmem>>, vector<16x48xf32>,
    return
  }
  func.func @transform_0(%arg0: i32, %arg1: i32) -> (i32, i32) {
    %c0_i32 = arith.constant 0 : i32
    %c0_i32_0 = arith.constant 0 : i32
    return %arg0, %c0_i32 : i32, i32
  }
  func.func @transform_1(%arg0: i32, %arg1: i32) -> (i32, i32) {
    %c0_i32 = arith.constant 0 : i32
    %c0_i32_0 = arith.constant 0 : i32
    return %c0_i32, %arg1 : i32, i32
  }
  func.func @transform_2(%arg0: i32, %arg1: i32) -> (i32, i32) {
    %c0_i32 = arith.constant 0 : i32
    %c0_i32_0 = arith.constant 0 : i32
    return %c0_i32, %arg1 : i32, i32
  }
  func.func @transform_3(%arg0: i32, %arg1: i32) -> (i32, i32) {
    %c0_i32 = arith.constant 0 : i32
    return %arg0, %arg1 : i32, i32
  }
}

</mosaic_0001>

<llo_original>
// kernel: tpu_custom_call.1
$region0: #{tpu_custom_call.1}
  #allocation0 [shape = 'u32[]', space=smem, size = 0x4, offset = 0x4, fixed_abs, tag = 'smem constant byte address 0x4 - core index']
  #allocation1 [shape = 'u32[144,128]{1,0:T(1,128)}', space=vmem, size = 0x12000, scoped, tag = 'internal scratch']
  %s0 = inlined_call_operand.vmem [shape: f32[16,96], index: 0, kind: input, shape index: {}]
  %s1 = inlined_call_operand.vmem [shape: f32[96,48], index: 1, kind: input, shape index: {}]
  %s2 = inlined_call_operand.vmem [shape: f32[1,48], index: 2, kind: input, shape index: {}]
  %s3 = inlined_call_operand.hbm [shape: f32[16,48], index: 3, kind: output, shape index: {}]
  %s4 = sld [smem:[#allocation0]]
  $region22: #{tpu_custom_call.1} parent=0
    _
  %s6 = ssub.s32 1, %s4
  %s7 = scalar_select 0, %s6, %s4
  $region1: #{tpu_custom_call.1} parent=0
    #allocation2 [shape = 'u8[8192]{0}', space=vmem, size = 0x2000, scoped, tag = 'output window, operand 0, single buffered']
    #allocation3 [shape = 's32[1]{0}', space=sflag, size = 0x4, scoped, tag = 'scoped memory for tpu_custom_call.1']
    %8 = vsyncpa [#allocation3], 0
    // Predicated region
    $region2: #{tpu_custom_call.1} parent=1 // pred_check
      _
    $region3: #{tpu_custom_call.1} parent=1 // pred_check_branch
      %10 = sbr.rel (0) target = $region5
    $region4: #{tpu_custom_call.1} parent=1 // pred_region
      _
    $region5: #{tpu_custom_call.1} parent=1 // pred_fallthru
      _
    // Predicated region
    $region6: #{tpu_custom_call.1} parent=1 // pred_check
      _
    $region7: #{tpu_custom_call.1} parent=1 // pred_check_branch
      %12 = sbr.rel (0) target = $region9
    $region8: #{tpu_custom_call.1} parent=1 // pred_region
      _
    $region9: #{tpu_custom_call.1} parent=1 // pred_fallthru
      _
    // Predicated region
    $region10: #{tpu_custom_call.1} parent=1 // pred_check
      _
    $region11: #{tpu_custom_call.1} parent=1 // pred_check_branch
      %14 = sbr.rel (0) target = $region13
    $region12: #{tpu_custom_call.1} parent=1 // pred_region
      _
    $region13: #{tpu_custom_call.1} parent=1 // pred_fallthru
      _
    %v15 = vld [vmem:[%s0] sm:$0xff]
    %v16 = vld [vmem:[%s0 + $0x8] sm:$0xff]
    %v17 = vld [vmem:[%s1] sm:$0xff]
    %v18 = vld [vmem:[%s1 + $0x8] sm:$0xff]
    %v19 = vld [vmem:[%s1 + $0x10] sm:$0xff]
    %v20 = vld [vmem:[%s1 + $0x18] sm:$0xff]
    %v21 = vld [vmem:[%s1 + $0x20] sm:$0xff]
    %v22 = vld [vmem:[%s1 + $0x28] sm:$0xff]
    %v23 = vld [vmem:[%s1 + $0x30] sm:$0xff]
    %v24 = vld [vmem:[%s1 + $0x38] sm:$0xff]
    %v25 = vld [vmem:[%s1 + $0x40] sm:$0xff]
    %v26 = vld [vmem:[%s1 + $0x48] sm:$0xff]
    %v27 = vld [vmem:[%s1 + $0x50] sm:$0xff]
    %v28 = vld [vmem:[%s1 + $0x58] sm:$0xff]
    %v29 = vld [vmem:[%s2] sm:$0x1]
    %v31 = vlaneseq
    %v32 = vshrl.u32 %v31, 7
    %v33 = vsub.s32 0, %v32
    %v34 = vrot.slane %v29, %v33
    %vm36 = vcmask 785408
    %v38 = vsel %vm36, %v15, 0
    %v41 = vsel %vm36, %v16, 0
    %43 = vmatprep.subr.mxu0 0.0
    %44 = vmatpush1.msra.mxu0 %v17
    %45 = vmatprep.subr.mxu0 0.0
    %46 = vmatpush1.msra.mxu0 %v18
    %47 = vmatprep.subr.mxu0 0.0
    %48 = vmatpush1.msra.mxu0 %v19
    %49 = vmatprep.subr.mxu0 0.0
    %50 = vmatpush1.msra.mxu0 %v20
    %51 = vmatprep.subr.mxu0 0.0
    %52 = vmatpush1.msra.mxu0 %v21
    %53 = vmatprep.subr.mxu0 0.0
    %54 = vmatpush1.msra.mxu0 %v22
    %55 = vmatprep.subr.mxu0 0.0
    %56 = vmatpush1.msra.mxu0 %v23
    %57 = vmatprep.subr.mxu0 0.0
    %58 = vmatpush1.msra.mxu0 %v24
    %59 = vmatprep.subr.mxu0 0.0
    %60 = vmatpush1.msra.mxu0 %v25
    %61 = vmatprep.subr.mxu0 0.0
    %62 = vmatpush1.msra.mxu0 %v26
    %63 = vmatprep.subr.mxu0 0.0
    %64 = vmatpush1.msra.mxu0 %v27
    %65 = vmatprep.subr.mxu0 0.0
    %66 = vmatpush1.msra.mxu0 %v28
    %67 = vmatprep.subr.mxu0 0.0
    %68 = vmatpush1.msra.mxu0 0.0
    %69 = vmatprep.subr.mxu0 0.0
    %70 = vmatpush1.msra.mxu0 0.0
    %71 = vmatprep.subr.mxu0 0.0
    %72 = vmatpush1.msra.mxu0 0.0
    %73 = vmatprep.subr.mxu0 0.0
    %74 = vmatpush1.msra.mxu0 0.0
    %75 = vmatprep.subr.mxu0 0.0
    %76 = vmatpush1.msra.mxu0 0.0
    %77 = vmatprep.subr.mxu0 0.0
    %78 = vmatpush1.msra.mxu0 0.0
    %79 = vmatprep.subr.mxu0 0.0
    %80 = vmatpush1.msra.mxu0 0.0
    %81 = vmatprep.subr.mxu0 0.0
    %82 = vmatpush1.msra.mxu0 0.0
    %83 = vmatprep.subr.mxu0 0.0
    %84 = vmatpush1.msra.mxu0 0.0
    %85 = vmatprep.subr.mxu0 0.0
    %86 = vmatpush1.msra.mxu0 0.0
    %87 = vmatprep.subr.mxu0 0.0
    %88 = vmatpush1.msra.mxu0 0.0
    %89 = vmatprep.subr.mxu0 0.0
    %90 = vmatpush1.msra.mxu0 0.0
    %91 = vmatprep.subr.mxu0 0.0
    %92 = vmatpush1.msra.mxu0 0.0
    %93 = vmatprep.subr.mxu0 0.0
    %94 = vmatpush1.msra.mxu0 0.0
    %95 = vmatprep.subr.mxu0 0.0
    %96 = vmatpush1.msra.mxu0 0.0
    %97 = vmatprep.subr.mxu0 0.0
    %98 = vmatpush1.msra.mxu0 0.0
    %99 = vmatprep.subr.mxu0 0.0
    %100 = vmatpush1.msra.mxu0 0.0
    %101 = vmatprep.subr.mxu0 0.0
    %102 = vmatpush1.msra.mxu0 0.0
    %103 = vmatprep.subr.mxu0 0.0
    %104 = vmatpush1.msra.mxu0 0.0
    %105 = vmatprep.subr.mxu0 0.0
    %106 = vmatpush1.msra.mxu0 0.0
    %107 = vmatprep.mubr.f32.mxu0 0.0
    %108 = vmatmul.mubr.f32.gmra.mrb[0].mxu0 %v38
    %v109 = vpop.f32.mrb[0].mxu0
    %v110 = vadd.f32 %v34, %v109
    %v111 = vpop.f32.mrb[0].mxu0
    %112 = vmatprep.mubr.f32.mxu0 0.0
    %113 = vmatmul.mubr.f32.gmra.mrb[0].mxu0 %v41
    %v114 = vpop.f32.mrb[0].mxu0
    %v115 = vadd.f32 %v34, %v114
    %v116 = vpop.f32.mrb[0].mxu0
    %117 = vdwg.mxu0
    %vm118 = vcmask 392192
    %119 = vst.msk [vmem:[#allocation2] sm:$0xff] %vm118, %v110
    %120 = vst.msk [vmem:[#allocation2 + $0x8] sm:$0xff] %vm118, %v115
    // Predicated region
    $region14: #{tpu_custom_call.1} parent=1 // pred_check
      _
    $region15: #{tpu_custom_call.1} parent=1 // pred_check_branch
      %122 = sbr.rel (0) target = $region17
    $region16: #{tpu_custom_call.1} parent=1 // pred_region
      %s124 = ssub.s32 256, 256
      %125 = vsyncadd [#allocation3], %s124
      %s126 = sshll.u32 [#allocation2], 4
      %s127 = int_to_ptr.vmem [resolvable:$true] %s126
      %132 = dma.vmem_to_hbm [thread:$0]  %s127, 256, %s3, [#allocation3], 128, 128, 8
    $region17: #{tpu_custom_call.1} parent=1 // pred_fallthru
      _
    // Predicated region
    $region18: #{tpu_custom_call.1} parent=1 // pred_check
      _
    $region19: #{tpu_custom_call.1} parent=1 // pred_check_branch
      %134 = sbr.rel (0) target = $region21
    $region20: #{tpu_custom_call.1} parent=1 // pred_region
      %135 = dma.done [#allocation3], 256
    $region21: #{tpu_custom_call.1} parent=1 // pred_fallthru
      _
    %136 = vsyncpa [#allocation3], 1

</llo_original>
